<compile_context>
chip_gen: v7x
topology: tpu7x:2x2x1
jax: 0.10.0
libtpu: 0.0.40
codegen_flags: <defaults>
</compile_context>

<pallas_src>
import jax
import jax.numpy as jnp
from jax import lax
from jax.experimental import pallas as pl
from jax.experimental.pallas import tpu as pltpu


def qnetwork_kernel(x_ref, w1_ref, b1_ref, w2_ref, b2_ref, out_ref):
    # x_ref : (bm, in)       -- streamed, native activation-major layout
    # w1_ref: (hidden, in)   -- PyTorch Linear layout, VMEM-resident
    # b1_ref: (hidden, 1)
    # w2_ref: (out, hidden)  -- PyTorch Linear layout, VMEM-resident
    # b2_ref: (out, 1)
    # out_ref: (out, bm)     -- feature-major (lane-dense) output tile
    #
    # Layer 1 (MXU): contract the shared `in` axis -> (hidden, bm).  The
    # orientation change on the streamed operand is hidden under the HBM DMA.
    h = lax.dot_general(
        w1_ref[...], x_ref[...],
        dimension_numbers=(((1,), (1,)), ((), ())),
        preferred_element_type=jnp.float32)
    # Bias + ReLU (VPU); bias (hidden, 1) broadcasts across the lane (batch) axis.
    h = jnp.maximum(h + b1_ref[...], 0.0)
    # Layer 2 (MXU): (out, hidden) @ (hidden, bm) -> (out, bm).
    o = jnp.dot(w2_ref[...], h, preferred_element_type=jnp.float32)
    out_ref[...] = (o + b2_ref[...]).astype(out_ref.dtype)


def qnetwork_forward(x, w1, b1, w2, b2, *, block_b=16384, use_pallas=None,
                     small_batch_threshold=512):
    """Forward pass of QNetwork: relu(x @ W1^T + b1) @ W2^T + b2.

    Weights are in PyTorch nn.Linear layout:
      w1: (hidden, in), b1: (hidden,), w2: (out, hidden), b2: (out,)
    x : (B, in) (cast to f32, like `state.float()` in the module).
    Returns (B, out) float32.
    """
    x = x.astype(jnp.float32)
    B, in_size = x.shape
    hidden = w1.shape[0]
    out_size = w2.shape[0]

    if use_pallas is None:
        use_pallas = B >= small_batch_threshold
    if not use_pallas:
        # Small-batch fast path: launch/pad overhead dwarfs the real work.
        return (jnp.maximum(x @ w1.T.astype(jnp.float32) + b1.astype(jnp.float32), 0.0)
                @ w2.T.astype(jnp.float32) + b2.astype(jnp.float32))

    LANE = 128
    bm = max(LANE, min(int(block_b), ((B + LANE - 1) // LANE) * LANE))
    bm = (bm // LANE) * LANE
    n_blocks = pl.cdiv(B, bm)

    # Tiny parameter reshapes only (weights are <10 KiB; no activation-sized passes).
    w1f = w1.astype(jnp.float32)                        # (hidden, in)
    w2f = w2.astype(jnp.float32)                        # (out, hidden)
    b1c = b1.reshape(hidden, 1).astype(jnp.float32)     # (hidden, 1)
    b2c = b2.reshape(out_size, 1).astype(jnp.float32)   # (out, 1)

    flops = 2 * B * (in_size * hidden + hidden * out_size)
    bytes_accessed = ((x.size + out_size * B) * 4
                      + (w1f.size + w2f.size + b1c.size + b2c.size) * 4)

    out_t = pl.pallas_call(
        qnetwork_kernel,
        out_shape=jax.ShapeDtypeStruct((out_size, B), jnp.float32),
        grid=(n_blocks,),
        in_specs=[
            pl.BlockSpec((bm, in_size), lambda i: (i, 0)),        # x: streamed per tile
            pl.BlockSpec((hidden, in_size), lambda i: (0, 0)),    # W1: VMEM-resident
            pl.BlockSpec((hidden, 1), lambda i: (0, 0)),          # b1
            pl.BlockSpec((out_size, hidden), lambda i: (0, 0)),   # W2: VMEM-resident
            pl.BlockSpec((out_size, 1), lambda i: (0, 0)),        # b2
        ],
        out_specs=pl.BlockSpec((out_size, bm), lambda i: (0, i)), # lane-dense output
        compiler_params=pltpu.CompilerParams(
            dimension_semantics=("parallel",),
            vmem_limit_bytes=48 * 1024 * 1024),
        cost_estimate=pl.CostEstimate(
            flops=flops, transcendentals=0, bytes_accessed=bytes_accessed),
    )(x, w1f, b1c, w2f, b2c)

    # Feature-major (out, B) -> activation-major (B, out).  Output is only 4
    # lanes wide, so this pass is ~20% of the kernel's own HBM traffic.
    return out_t.T


def init_params(key, input_size=37, hidden=64, output_size=4):
    # PyTorch-Linear-style uniform(-1/sqrt(fan_in), +1/sqrt(fan_in)) init,
    # in PyTorch layout: W (out_features, in_features), b (out_features,).
    k1, k2, k3, k4 = jax.random.split(key, 4)
    bound1 = 1.0 / jnp.sqrt(jnp.float32(input_size))
    bound2 = 1.0 / jnp.sqrt(jnp.float32(hidden))
    w1 = jax.random.uniform(k1, (hidden, input_size), jnp.float32, -bound1, bound1)
    b1 = jax.random.uniform(k2, (hidden,), jnp.float32, -bound1, bound1)
    w2 = jax.random.uniform(k3, (output_size, hidden), jnp.float32, -bound2, bound2)
    b2 = jax.random.uniform(k4, (output_size,), jnp.float32, -bound2, bound2)
    return w1, b1, w2, b2


if __name__ == "__main__":
    key = jax.random.PRNGKey(0)
    k_x1, k_x2, k_p = jax.random.split(key, 3)

    INPUT, HIDDEN, OUTPUT = 37, 64, 4
    w1, b1, w2, b2 = init_params(k_p, INPUT, HIDDEN, OUTPUT)

    def ref_fwd(x):
        return jnp.maximum(x @ w1.T + b1, 0.0) @ w2.T + b2

    # 1) Pallas path (forced): B=300 with block_b=128 exercises a multi-block
    #    grid including a partial last block (masked writes on the tail).
    B_BIG = 300
    x_big = jax.random.normal(k_x2, (B_BIG, INPUT), jnp.float32)
    out_big = qnetwork_forward(x_big, w1, b1, w2, b2, block_b=128, use_pallas=True)
    jax.block_until_ready(out_big)
    assert out_big.shape == (B_BIG, OUTPUT)
    err_big = float(jnp.max(jnp.abs(out_big - ref_fwd(x_big))))
    assert jnp.allclose(out_big, ref_fwd(x_big), atol=2e-2, rtol=2e-2), err_big

    # 2) Small-batch fast path (the actual RL-inference case): B=2.
    B_SMALL = 2
    x_small = jax.random.normal(k_x1, (B_SMALL, INPUT), jnp.float32)
    out_small = qnetwork_forward(x_small, w1, b1, w2, b2)
    jax.block_until_ready(out_small)
    assert out_small.shape == (B_SMALL, OUTPUT)
    assert jnp.allclose(out_small, ref_fwd(x_small), atol=1e-5, rtol=1e-5)

    print("KERNEL_OK")
</pallas_src>

<mosaic_0001>
module attributes {stable_mosaic.version = 11 : i64} {
  func.func @qnetwork_kernel(%arg0: i32, %arg1: memref<128x37xf32, #tpu.memory_space<vmem>>, %arg2: memref<64x37xf32, #tpu.memory_space<vmem>>, %arg3: memref<64x1xf32, #tpu.memory_space<vmem>>, %arg4: memref<4x64xf32, #tpu.memory_space<vmem>>, %arg5: memref<4x1xf32, #tpu.memory_space<vmem>>, %arg6: memref<4x128xf32, #tpu.memory_space<vmem>>) attributes {dimension_semantics = [#tpu.dimension_semantics<parallel>], iteration_bounds = array<i64: 3>, scalar_prefetch = 0 : i64, scratch_operands = 0 : i64, tpu.core_type = #tpu.core_type<tc>, window_params = [{transform_indices = @transform_0, window_bounds = array<i64: 128, 37>}, {pipeline_mode = #tpu.pipeline_mode<synchronous>, transform_indices = @transform_1, window_bounds = array<i64: 64, 37>}, {pipeline_mode = #tpu.pipeline_mode<synchronous>, transform_indices = @transform_2, window_bounds = array<i64: 64, 1>}, {pipeline_mode = #tpu.pipeline_mode<synchronous>, transform_indices = @transform_3, window_bounds = array<i64: 4, 64>}, {pipeline_mode = #tpu.pipeline_mode<synchronous>, transform_indices = @transform_4, window_bounds = array<i64: 4, 1>}, {transform_indices = @transform_5, window_bounds = array<i64: 4, 128>}]} {
    %c0 = arith.constant 0 : index
    %c0_0 = arith.constant 0 : index
    %0 = vector.load %arg2[%c0, %c0_0] : memref<64x37xf32, #tpu.memory_space<vmem>>, vector<64x37xf32>
    %c0_1 = arith.constant 0 : index
    %c0_2 = arith.constant 0 : index
    %1 = vector.load %arg1[%c0_1, %c0_2] : memref<128x37xf32, #tpu.memory_space<vmem>>, vector<128x37xf32>
    %cst = arith.constant dense<0.000000e+00> : vector<64x128xf32>
    %2 = tpu.matmul %0, %1, %cst {dimension_numbers = #tpu.dot_dimension_numbers<[1], [1], [0], [0], [0, 0, 1, 0], [], []>} : vector<64x37xf32>, vector<128x37xf32>, vector<64x128xf32> -> vector<64x128xf32>
    %c0_3 = arith.constant 0 : index
    %c0_4 = arith.constant 0 : index
    %3 = vector.load %arg3[%c0_3, %c0_4] : memref<64x1xf32, #tpu.memory_space<vmem>>, vector<64x1xf32>
    %4 = vector.broadcast %3 : vector<64x1xf32> to vector<64x128xf32>
    %5 = arith.addf %2, %4 : vector<64x128xf32>
    %cst_5 = arith.constant 0.000000e+00 : f32
    %6 = vector.broadcast %cst_5 : f32 to vector<64x128xf32>
    %7 = arith.maximumf %5, %6 : vector<64x128xf32>
    %c0_6 = arith.constant 0 : index
    %c0_7 = arith.constant 0 : index
    %8 = vector.load %arg4[%c0_6, %c0_7] : memref<4x64xf32, #tpu.memory_space<vmem>>, vector<4x64xf32>
    %cst_8 = arith.constant dense<0.000000e+00> : vector<4x128xf32>
    %9 = tpu.matmul %8, %7, %cst_8 {dimension_numbers = #tpu.dot_dimension_numbers<[1], [0], [0], [1], [0, 0, 1, 1], [], []>} : vector<4x64xf32>, vector<64x128xf32>, vector<4x128xf32> -> vector<4x128xf32>
    %c0_9 = arith.constant 0 : index
    %c0_10 = arith.constant 0 : index
    %10 = vector.load %arg5[%c0_9, %c0_10] : memref<4x1xf32, #tpu.memory_space<vmem>>, vector<4x1xf32>
    %11 = vector.broadcast %10 : vector<4x1xf32> to vector<4x128xf32>
    %12 = arith.addf %9, %11 : vector<4x128xf32>
    %c0_11 = arith.constant 0 : index
    %c0_12 = arith.constant 0 : index
    %13 = vector.load %arg6[%c0_11, %c0_12] : memref<4x128xf32, #tpu.memory_space<vmem>>, vector<4x128xf32>
    tpu.vector_store %arg6[%c0_11, %c0_12], %12 {strides = array<i32>} : memref<4x128xf32, #tpu.memory_space<vmem>>, vector<4x128xf32>,
    return
  }
  func.func @transform_0(%arg0: i32) -> (i32, i32) {
    %c0_i32 = arith.constant 0 : i32
    %c0_i32_0 = arith.constant 0 : i32
    return %arg0, %c0_i32 : i32, i32
  }
  func.func @transform_1(%arg0: i32) -> (i32, i32) {
    %c0_i32 = arith.constant 0 : i32
    %c0_i32_0 = arith.constant 0 : i32
    %c0_i32_1 = arith.constant 0 : i32
    return %c0_i32, %c0_i32_0 : i32, i32
  }
  func.func @transform_2(%arg0: i32) -> (i32, i32) {
    %c0_i32 = arith.constant 0 : i32
    %c0_i32_0 = arith.constant 0 : i32
    %c0_i32_1 = arith.constant 0 : i32
    return %c0_i32, %c0_i32_0 : i32, i32
  }
  func.func @transform_3(%arg0: i32) -> (i32, i32) {
    %c0_i32 = arith.constant 0 : i32
    %c0_i32_0 = arith.constant 0 : i32
    %c0_i32_1 = arith.constant 0 : i32
    return %c0_i32, %c0_i32_0 : i32, i32
  }
  func.func @transform_4(%arg0: i32) -> (i32, i32) {
    %c0_i32 = arith.constant 0 : i32
    %c0_i32_0 = arith.constant 0 : i32
    %c0_i32_1 = arith.constant 0 : i32
    return %c0_i32, %c0_i32_0 : i32, i32
  }
  func.func @transform_5(%arg0: i32) -> (i32, i32) {
    %c0_i32 = arith.constant 0 : i32
    %c0_i32_0 = arith.constant 0 : i32
    return %c0_i32, %arg0 : i32, i32
  }
}

</mosaic_0001>

<llo_original>
// kernel: tpu_custom_call.1
$region0: #{tpu_custom_call.1}
  #allocation0 [shape = 'u32[]', space=smem, size = 0x4, offset = 0x4, fixed_abs, tag = 'smem constant byte address 0x4 - core index']
  #allocation1 [shape = 'u32[144,128]{1,0:T(1,128)}', space=vmem, size = 0x12000, scoped, tag = 'internal scratch']
  %s0 = inlined_call_operand.vmem [shape: f32[300,37], index: 0, kind: input, shape index: {}]
  %s1 = inlined_call_operand.vmem [shape: f32[64,37], index: 1, kind: input, shape index: {}]
  %s2 = inlined_call_operand.vmem [shape: f32[64,1], index: 2, kind: input, shape index: {}]
  %s3 = inlined_call_operand.vmem [shape: f32[4,64], index: 3, kind: input, shape index: {}]
  %s4 = inlined_call_operand.vmem [shape: f32[4,1], index: 4, kind: input, shape index: {}]
  %s5 = inlined_call_operand.hbm [shape: f32[4,300], index: 5, kind: output, shape index: {}]
  %s6 = sld [smem:[#allocation0]]
  $region53: #{tpu_custom_call.1} parent=0
    _
  %s8 = ssub.s32 1, %s6
  %s9 = scalar_select 0, %s8, %s6
  $region1: #{tpu_custom_call.1} parent=0
    #allocation2 [shape = 'u8[4096]{0}', space=vmem, size = 0x1000, scoped, tag = 'output window, operand 0']
    #allocation3 [shape = 's32[2]{0}', space=sflag, size = 0x8, scoped, tag = 'scoped memory for tpu_custom_call.1']
    %10 = vsyncpa [#allocation3], 0
    %s11 = scalar_lea.sflag [#allocation3], 1
    %12 = vsyncpa %s11, 0
    loop: start=0, step=1, limit=5
    $region2: #{tpu_custom_call.1} parent=1 // loop_pre_header
      _
    $region3: #{tpu_custom_call.1} parent=1 // loop_header
      %s14 = sphi 0, %s18
      %p15 = scmp.ge.s32.totalorder %s14, 5
      %s24 = sphi 0, %s26
      %s27 = sphi 0, %s24
      %s28 = sphi 0, %s27
      %s44 = sphi 0, %s28
      %s48 = sphi 0, %s48
      %s50 = sphi 0, %s48
      %s51 = sphi 0, %s50
      %s65 = sphi 0, %s51
      %s69 = sphi 0, %s69
      %s71 = sphi 0, %s69
      %s72 = sphi 0, %s71
      %s86 = sphi 0, %s72
      %s90 = sphi 0, %s90
      %s92 = sphi 0, %s90
      %s93 = sphi 0, %s92
      %s107 = sphi 0, %s93
      %s111 = sphi 0, %s111
      %s113 = sphi 0, %s111
      %s114 = sphi 0, %s113
      %s128 = sphi 0, %s114
      %s134 = sphi 0, %s136
      %s137 = sphi 0, %s134
      %s138 = sphi 0, %s137
      %s154 = sphi 0, %s138
    $region4: #{tpu_custom_call.1} parent=1 // loop_header_branch
      %17 = sbr.rel (%p15) target = $region8
    $region5: #{tpu_custom_call.1} parent=1 // loop_body
      %s19 = ssub.s32 %s14, 1
      %s20 = ssub.s32 %s14, 2
      %s21 = sadd.s32 %s14, 1
      %s22 = ssub.s32 %s14, %s21
      %p23 = scmp.eq.s32.totalorder %s22, 0
      %s25 = sadd.s32 %s24, 1
      %s26 = scalar_select %p23, %s24, %s25
      %p29 = pneg %p23
      %p30 = scmp.eq.s32.totalorder %s14, 2
      %p31 = por %p29, %p30
      %p32 = scmp.ne.s32.totalorder %s24, %s27
      %p33 = scmp.eq.s32.totalorder %s14, 0
      %p34 = por %p32, %p33
      %p35 = scmp.ne.s32.totalorder %s24, %s27
      %p36 = scmp.eq.s32.totalorder %s19, 2
      %p37 = por %p35, %p36
      %p38 = scmp.ne.s32.totalorder %s27, %s28
      %p39 = scmp.eq.s32.totalorder %s19, 0
      %p40 = por %p38, %p39
      %p41 = scmp.ne.s32.totalorder %s27, %s28
      %p42 = scmp.eq.s32.totalorder %s20, 2
      %p43 = por %p41, %p42
      %p45 = scmp.ne.s32.totalorder %s28, %s44
      %p46 = scmp.eq.s32.totalorder %s20, 0
      %p47 = por %p45, %p46
      %s49 = sadd.s32 %s48, 1
      %p52 = scmp.eq.s32.totalorder %s14, 2
      %p53 = scmp.ne.s32.totalorder %s48, %s50
      %p54 = scmp.eq.s32.totalorder %s14, 0
      %p55 = por %p53, %p54
      %p56 = scmp.ne.s32.totalorder %s48, %s50
      %p57 = scmp.eq.s32.totalorder %s19, 2
      %p58 = por %p56, %p57
      %p59 = scmp.ne.s32.totalorder %s50, %s51
      %p60 = scmp.eq.s32.totalorder %s19, 0
      %p61 = por %p59, %p60
      %p62 = scmp.ne.s32.totalorder %s50, %s51
      %p63 = scmp.eq.s32.totalorder %s20, 2
      %p64 = por %p62, %p63
      %p66 = scmp.ne.s32.totalorder %s51, %s65
      %p67 = scmp.eq.s32.totalorder %s20, 0
      %p68 = por %p66, %p67
      %s70 = sadd.s32 %s69, 1
      %p73 = scmp.eq.s32.totalorder %s14, 2
      %p74 = scmp.ne.s32.totalorder %s69, %s71
      %p75 = scmp.eq.s32.totalorder %s14, 0
      %p76 = por %p74, %p75
      %p77 = scmp.ne.s32.totalorder %s69, %s71
      %p78 = scmp.eq.s32.totalorder %s19, 2
      %p79 = por %p77, %p78
      %p80 = scmp.ne.s32.totalorder %s71, %s72
      %p81 = scmp.eq.s32.totalorder %s19, 0
      %p82 = por %p80, %p81
      %p83 = scmp.ne.s32.totalorder %s71, %s72
      %p84 = scmp.eq.s32.totalorder %s20, 2
      %p85 = por %p83, %p84
      %p87 = scmp.ne.s32.totalorder %s72, %s86
      %p88 = scmp.eq.s32.totalorder %s20, 0
      %p89 = por %p87, %p88
      %s91 = sadd.s32 %s90, 1
      %p94 = scmp.eq.s32.totalorder %s14, 2
      %p95 = scmp.ne.s32.totalorder %s90, %s92
      %p96 = scmp.eq.s32.totalorder %s14, 0
      %p97 = por %p95, %p96
      %p98 = scmp.ne.s32.totalorder %s90, %s92
      %p99 = scmp.eq.s32.totalorder %s19, 2
      %p100 = por %p98, %p99
      %p101 = scmp.ne.s32.totalorder %s92, %s93
      %p102 = scmp.eq.s32.totalorder %s19, 0
      %p103 = por %p101, %p102
      %p104 = scmp.ne.s32.totalorder %s92, %s93
      %p105 = scmp.eq.s32.totalorder %s20, 2
      %p106 = por %p104, %p105
      %p108 = scmp.ne.s32.totalorder %s93, %s107
      %p109 = scmp.eq.s32.totalorder %s20, 0
      %p110 = por %p108, %p109
      %s112 = sadd.s32 %s111, 1
      %p115 = scmp.eq.s32.totalorder %s14, 2
      %p116 = scmp.ne.s32.totalorder %s111, %s113
      %p117 = scmp.eq.s32.totalorder %s14, 0
      %p118 = por %p116, %p117
      %p119 = scmp.ne.s32.totalorder %s111, %s113
      %p120 = scmp.eq.s32.totalorder %s19, 2
      %p121 = por %p119, %p120
      %p122 = scmp.ne.s32.totalorder %s113, %s114
      %p123 = scmp.eq.s32.totalorder %s19, 0
      %p124 = por %p122, %p123
      %p125 = scmp.ne.s32.totalorder %s113, %s114
      %p126 = scmp.eq.s32.totalorder %s20, 2
      %p127 = por %p125, %p126
      %p129 = scmp.ne.s32.totalorder %s114, %s128
      %p130 = scmp.eq.s32.totalorder %s20, 0
      %p131 = por %p129, %p130
      %s132 = ssub.s32 %s14, %s21
      %p133 = scmp.eq.s32.totalorder %s132, 0
      %s135 = sadd.s32 %s134, 1
      %s136 = scalar_select %p133, %s134, %s135
      %p139 = pneg %p133
      %p140 = scmp.eq.s32.totalorder %s14, 2
      %p141 = por %p139, %p140
      %p142 = scmp.ne.s32.totalorder %s134, %s137
      %p143 = scmp.eq.s32.totalorder %s14, 0
      %p144 = por %p142, %p143
      %p145 = scmp.ne.s32.totalorder %s134, %s137
      %p146 = scmp.eq.s32.totalorder %s19, 2
      %p147 = por %p145, %p146
      %p148 = scmp.ne.s32.totalorder %s137, %s138
      %p149 = scmp.eq.s32.totalorder %s19, 0
      %p150 = por %p148, %p149
      %p151 = scmp.ne.s32.totalorder %s137, %s138
      %p152 = scmp.eq.s32.totalorder %s20, 2
      %p153 = por %p151, %p152
      %p155 = scmp.ne.s32.totalorder %s138, %s154
      %p156 = scmp.eq.s32.totalorder %s20, 0
      %p157 = por %p155, %p156
      %p158 = scmp.le.s32.totalorder 1, %s14
      %p159 = scmp.lt.s32.totalorder %s14, 4
      %p160 = pnand %p158, %p159
      %p161 = pneg %p160
      // Predicated region
      $region9: #{tpu_custom_call.1} parent=5 // pred_check
        _
      $region10: #{tpu_custom_call.1} parent=5 // pred_check_branch
        %163 = sbr.rel (%p160) target = $region12
      $region11: #{tpu_custom_call.1} parent=5 // pred_region
        %s164 = ssub.s32 %s14, 1
        // Predicated region
        $region13: #{tpu_custom_call.1} parent=11 // pred_check
          %p165 = pneg %p61
        $region14: #{tpu_custom_call.1} parent=11 // pred_check_branch
          %167 = sbr.rel (%p165) target = $region16
        $region15: #{tpu_custom_call.1} parent=11 // pred_region
          _
        $region16: #{tpu_custom_call.1} parent=11 // pred_fallthru
          _
        // Predicated region
        $region17: #{tpu_custom_call.1} parent=11 // pred_check
          %p168 = pneg %p82
        $region18: #{tpu_custom_call.1} parent=11 // pred_check_branch
          %170 = sbr.rel (%p168) target = $region20
        $region19: #{tpu_custom_call.1} parent=11 // pred_region
          _
        $region20: #{tpu_custom_call.1} parent=11 // pred_fallthru
          _
        // Predicated region
        $region21: #{tpu_custom_call.1} parent=11 // pred_check
          %p171 = pneg %p103
        $region22: #{tpu_custom_call.1} parent=11 // pred_check_branch
          %173 = sbr.rel (%p171) target = $region24
        $region23: #{tpu_custom_call.1} parent=11 // pred_region
          _
        $region24: #{tpu_custom_call.1} parent=11 // pred_fallthru
          _
        // Predicated region
        $region25: #{tpu_custom_call.1} parent=11 // pred_check
          %p174 = pneg %p124
        $region26: #{tpu_custom_call.1} parent=11 // pred_check_branch
          %176 = sbr.rel (%p174) target = $region28
        $region27: #{tpu_custom_call.1} parent=11 // pred_region
          _
        $region28: #{tpu_custom_call.1} parent=11 // pred_fallthru
          _
      $region12: #{tpu_custom_call.1} parent=5 // pred_fallthru
        _
      %p177 = scmp.lt.s32.totalorder %s14, 3
      // Predicated region
      $region29: #{tpu_custom_call.1} parent=5 // pred_check
        %p178 = pneg %p177
      $region30: #{tpu_custom_call.1} parent=5 // pred_check_branch
        %180 = sbr.rel (%p178) target = $region32
      $region31: #{tpu_custom_call.1} parent=5 // pred_region
        // Predicated region
        $region33: #{tpu_custom_call.1} parent=31 // pred_check
          %p181 = pneg %p34
        $region34: #{tpu_custom_call.1} parent=31 // pred_check_branch
          %183 = sbr.rel (%p181) target = $region36
        $region35: #{tpu_custom_call.1} parent=31 // pred_region
          %s184 = smul.u32 16, %s14
          %s185 = ssub.s32 38, %s184
          %p186 = scmp.lt.s32.totalorder %s185, 16
          %s187 = scalar_select %p186, %s185, 16
          %s188 = smul.u32 128, %s187
          %p189 = scmp.lt.s32.totalorder %s184, 37
          %s190 = scalar_select %p189, %s184, 37
          %s191 = smul.addr %s190, 8
          %s192 = scalar_lea.vmem %s0, %s191
          %s193 = smul.u32 16, %s14
          %s194 = ssub.s32 38, %s193
          %p195 = scmp.lt.s32.totalorder %s194, 16
          %s196 = scalar_select %p195, %s194, 16
          %s197 = smul.u32 128, %s196
        $region36: #{tpu_custom_call.1} parent=31 // pred_fallthru
          _
      $region32: #{tpu_custom_call.1} parent=5 // pred_fallthru
        _
      %p198 = scmp.le.s32.totalorder 1, %s14
      %p199 = scmp.lt.s32.totalorder %s14, 4
      %p200 = pnand %p198, %p199
      %p201 = pneg %p200
      // Predicated region
      $region37: #{tpu_custom_call.1} parent=5 // pred_check
        _
      $region38: #{tpu_custom_call.1} parent=5 // pred_check_branch
        %203 = sbr.rel (%p200) target = $region40
      $region39: #{tpu_custom_call.1} parent=5 // pred_region
        %s204 = ssub.s32 %s14, 1
        %s205 = smul.u32 16, %s19
        %s206 = ssub.s32 38, %s205
        %p207 = scmp.lt.s32.totalorder %s206, 16
        %s208 = scalar_select %p207, %s206, 16
        %s209 = smul.u32 128, %s208
        %p210 = scmp.lt.s32.totalorder %s205, 37
        %s211 = scalar_select %p210, %s205, 37
        %s212 = smul.addr %s211, 8
        %s213 = scalar_lea.vmem %s0, %s212
        %p214 = pneg %p40
        %p215 = pneg %p37
        %p216 = pneg %p61
        %p217 = pneg %p58
        %p218 = pneg %p82
        %p219 = pneg %p79
        %p220 = pneg %p103
        %p221 = pneg %p100
        %p222 = pneg %p124
        %p223 = pneg %p121
        %p224 = pneg %p150
        %p225 = pneg %p147
        %s226 = sand.u32 %s137, 1
        %s227 = scalar_lea.sflag [#allocation3], %s226
        %s228 = sand.u32 %s137, 1
        %s229 = smul.addr %s228, 4
        %s230 = scalar_lea.vmem [#allocation2], %s229
        %s231 = smul.u32 16, %s19
        %s232 = ssub.s32 38, %s231
        %p233 = scmp.lt.s32.totalorder %s232, 16
        %s234 = scalar_select %p233, %s232, 16
        %s235 = smul.u32 128, %s234
        %p236 = scmp.lt.s32.totalorder %s231, 37
        %s237 = scalar_select %p236, %s231, 37
        %s238 = smul.addr %s237, 8
        %s239 = scalar_lea.vmem %s0, %s238
        %s240 = smul.u32 16, %s19
        %s241 = ssub.s32 38, %s240
        %p242 = scmp.lt.s32.totalorder %s241, 16
        %s243 = scalar_select %p242, %s241, 16
        %s244 = smul.u32 128, %s243
        %v245 = vld [vmem:[%s1] sm:$0xff]
        %v246 = vld [vmem:[%s1 + $0x8] sm:$0xff]
        %v247 = vld [vmem:[%s1 + $0x10] sm:$0xff]
        %v248 = vld [vmem:[%s1 + $0x18] sm:$0xff]
        %v249 = vld [vmem:[%s1 + $0x20] sm:$0xff]
        %v250 = vld [vmem:[%s1 + $0x28] sm:$0xff]
        %v251 = vld [vmem:[%s1 + $0x30] sm:$0xff]
        %v252 = vld [vmem:[%s1 + $0x38] sm:$0xff]
        %v253 = vld [vmem:[%s239] sm:$0xff]
        %v254 = vld [vmem:[%s239 + $0x8] sm:$0xff]
        %v255 = vld [vmem:[%s239 + $0x10] sm:$0xff]
        %v256 = vld [vmem:[%s239 + $0x18] sm:$0xff]
        %v257 = vld [vmem:[%s239 + $0x20] sm:$0xff]
        %v258 = vld [vmem:[%s239 + $0x28] sm:$0xff]
        %v259 = vld [vmem:[%s239 + $0x30] sm:$0xff]
        %v260 = vld [vmem:[%s239 + $0x38] sm:$0xff]
        %v261 = vld [vmem:[%s239 + $0x40] sm:$0xff]
        %v262 = vld [vmem:[%s239 + $0x48] sm:$0xff]
        %v263 = vld [vmem:[%s239 + $0x50] sm:$0xff]
        %v264 = vld [vmem:[%s239 + $0x58] sm:$0xff]
        %v265 = vld [vmem:[%s239 + $0x60] sm:$0xff]
        %v266 = vld [vmem:[%s239 + $0x68] sm:$0xff]
        %v267 = vld [vmem:[%s239 + $0x70] sm:$0xff]
        %v268 = vld [vmem:[%s239 + $0x78] sm:$0xff]
        %v269 = vld [vmem:[%s2] sm:$0xff]
        %v270 = vld [vmem:[%s2 + $0x8] sm:$0xff]
        %v271 = vld [vmem:[%s2 + $0x10] sm:$0xff]
        %v272 = vld [vmem:[%s2 + $0x18] sm:$0xff]
        %v273 = vld [vmem:[%s2 + $0x20] sm:$0xff]
        %v274 = vld [vmem:[%s2 + $0x28] sm:$0xff]
        %v275 = vld [vmem:[%s2 + $0x30] sm:$0xff]
        %v276 = vld [vmem:[%s2 + $0x38] sm:$0xff]
        %278 = vset.pattern.permute.xlu0 0
        %279 = vperm.xlu0 %278, %v269
        %v280 = vpop.permute.xlu0 %279
        %283 = vset.pattern.permute.xlu0 0
        %284 = vperm.xlu0 %283, %v270
        %v285 = vpop.permute.xlu0 %284
        %288 = vset.pattern.permute.xlu0 0
        %289 = vperm.xlu0 %288, %v271
        %v290 = vpop.permute.xlu0 %289
        %293 = vset.pattern.permute.xlu0 0
        %294 = vperm.xlu0 %293, %v272
        %v295 = vpop.permute.xlu0 %294
        %298 = vset.pattern.permute.xlu0 0
        %299 = vperm.xlu0 %298, %v273
        %v300 = vpop.permute.xlu0 %299
        %303 = vset.pattern.permute.xlu0 0
        %304 = vperm.xlu0 %303, %v274
        %v305 = vpop.permute.xlu0 %304
        %308 = vset.pattern.permute.xlu0 0
        %309 = vperm.xlu0 %308, %v275
        %v310 = vpop.permute.xlu0 %309
        %313 = vset.pattern.permute.xlu0 0
        %314 = vperm.xlu0 %313, %v276
        %v315 = vpop.permute.xlu0 %314
        %vm317 = vcmask 302080
        %v319 = vsel %vm317, %v245, 0
        %v322 = vsel %vm317, %v246, 0
        %v325 = vsel %vm317, %v247, 0
        %v328 = vsel %vm317, %v248, 0
        %v331 = vsel %vm317, %v249, 0
        %v334 = vsel %vm317, %v250, 0
        %v337 = vsel %vm317, %v251, 0
        %v340 = vsel %vm317, %v252, 0
        %v343 = vsel %vm317, %v253, 0
        %v346 = vsel %vm317, %v254, 0
        %v349 = vsel %vm317, %v255, 0
        %v352 = vsel %vm317, %v256, 0
        %v355 = vsel %vm317, %v257, 0
        %v358 = vsel %vm317, %v258, 0
        %v361 = vsel %vm317, %v259, 0
        %v364 = vsel %vm317, %v260, 0
        %v367 = vsel %vm317, %v261, 0
        %v370 = vsel %vm317, %v262, 0
        %v373 = vsel %vm317, %v263, 0
        %v376 = vsel %vm317, %v264, 0
        %v379 = vsel %vm317, %v265, 0
        %v382 = vsel %vm317, %v266, 0
        %v385 = vsel %vm317, %v267, 0
        %v388 = vsel %vm317, %v268, 0
        %390 = vmatprep.subr.mxu0 0.0
        %391 = vmatpush1.xpose.msra.mxu0 %v343
        %392 = vmatprep.subr.mxu0 0.0
        %393 = vmatpush1.xpose.msra.mxu0 %v346
        %394 = vmatprep.subr.mxu0 0.0
        %395 = vmatpush1.xpose.msra.mxu0 %v349
        %396 = vmatprep.subr.mxu0 0.0
        %397 = vmatpush1.xpose.msra.mxu0 %v352
        %398 = vmatprep.subr.mxu0 0.0
        %399 = vmatpush1.xpose.msra.mxu0 %v355
        %400 = vmatprep.subr.mxu0 0.0
        %401 = vmatpush1.xpose.msra.mxu0 %v358
        %402 = vmatprep.subr.mxu0 0.0
        %403 = vmatpush1.xpose.msra.mxu0 %v361
        %404 = vmatprep.subr.mxu0 0.0
        %405 = vmatpush1.xpose.msra.mxu0 %v364
        %406 = vmatprep.subr.mxu0 0.0
        %407 = vmatpush1.xpose.msra.mxu0 %v367
        %408 = vmatprep.subr.mxu0 0.0
        %409 = vmatpush1.xpose.msra.mxu0 %v370
        %410 = vmatprep.subr.mxu0 0.0
        %411 = vmatpush1.xpose.msra.mxu0 %v373
        %412 = vmatprep.subr.mxu0 0.0
        %413 = vmatpush1.xpose.msra.mxu0 %v376
        %414 = vmatprep.subr.mxu0 0.0
        %415 = vmatpush1.xpose.msra.mxu0 %v379
        %416 = vmatprep.subr.mxu0 0.0
        %417 = vmatpush1.xpose.msra.mxu0 %v382
        %418 = vmatprep.subr.mxu0 0.0
        %419 = vmatpush1.xpose.msra.mxu0 %v385
        %420 = vmatprep.subr.mxu0 0.0
        %421 = vmatpush1.xpose.msra.mxu0 %v388
        %422 = vmatprep.subr.mxu0 0.0
        %423 = vmatpush1.xpose.msra.mxu0 0.0
        %424 = vmatprep.subr.mxu0 0.0
        %425 = vmatpush1.xpose.msra.mxu0 0.0
        %426 = vmatprep.subr.mxu0 0.0
        %427 = vmatpush1.xpose.msra.mxu0 0.0
        %428 = vmatprep.subr.mxu0 0.0
        %429 = vmatpush1.xpose.msra.mxu0 0.0
        %430 = vmatprep.subr.mxu0 0.0
        %431 = vmatpush1.xpose.msra.mxu0 0.0
        %432 = vmatprep.subr.mxu0 0.0
        %433 = vmatpush1.xpose.msra.mxu0 0.0
        %434 = vmatprep.subr.mxu0 0.0
        %435 = vmatpush1.xpose.msra.mxu0 0.0
        %436 = vmatprep.subr.mxu0 0.0
        %437 = vmatpush1.xpose.msra.mxu0 0.0
        %438 = vmatprep.subr.mxu0 0.0
        %439 = vmatpush1.xpose.msra.mxu0 0.0
        %440 = vmatprep.subr.mxu0 0.0
        %441 = vmatpush1.xpose.msra.mxu0 0.0
        %442 = vmatprep.subr.mxu0 0.0
        %443 = vmatpush1.xpose.msra.mxu0 0.0
        %444 = vmatprep.subr.mxu0 0.0
        %445 = vmatpush1.xpose.msra.mxu0 0.0
        %446 = vmatprep.subr.mxu0 0.0
        %447 = vmatpush1.xpose.msra.mxu0 0.0
        %448 = vmatprep.subr.mxu0 0.0
        %449 = vmatpush1.xpose.msra.mxu0 0.0
        %450 = vmatprep.subr.mxu0 0.0
        %451 = vmatpush1.xpose.msra.mxu0 0.0
        %452 = vmatprep.subr.mxu0 0.0
        %453 = vmatpush1.xpose.msra.mxu0 0.0
        %454 = vmatprep.mubr.f32.mxu0 0.0
        %455 = vmatmul.mubr.f32.gmra.mrb[0].mxu0 %v319
        %v456 = vpop.f32.mrb[0].mxu0
        %v457 = vadd.f32 %v280, %v456
        %v458 = vpop.f32.mrb[0].mxu0
        %459 = vmatprep.mubr.f32.mxu0 0.0
        %460 = vmatmul.mubr.f32.gmra.mrb[0].mxu0 %v322
        %v461 = vpop.f32.mrb[0].mxu0
        %v462 = vadd.f32 %v285, %v461
        %v463 = vpop.f32.mrb[0].mxu0
        %464 = vmatprep.mubr.f32.mxu0 0.0
        %465 = vmatmul.mubr.f32.gmra.mrb[0].mxu0 %v325
        %v466 = vpop.f32.mrb[0].mxu0
        %v467 = vadd.f32 %v290, %v466
        %v468 = vpop.f32.mrb[0].mxu0
        %469 = vmatprep.mubr.f32.mxu0 0.0
        %470 = vmatmul.mubr.f32.gmra.mrb[0].mxu0 %v328
        %v471 = vpop.f32.mrb[0].mxu0
        %v472 = vadd.f32 %v295, %v471
        %v473 = vpop.f32.mrb[0].mxu0
        %474 = vmatprep.mubr.f32.mxu0 0.0
        %475 = vmatmul.mubr.f32.gmra.mrb[0].mxu0 %v331
        %v476 = vpop.f32.mrb[0].mxu0
        %v477 = vadd.f32 %v300, %v476
        %v478 = vpop.f32.mrb[0].mxu0
        %479 = vmatprep.mubr.f32.mxu0 0.0
        %480 = vmatmul.mubr.f32.gmra.mrb[0].mxu0 %v334
        %v481 = vpop.f32.mrb[0].mxu0
        %v482 = vadd.f32 %v305, %v481
        %v483 = vpop.f32.mrb[0].mxu0
        %484 = vmatprep.mubr.f32.mxu0 0.0
        %485 = vmatmul.mubr.f32.gmra.mrb[0].mxu0 %v337
        %v486 = vpop.f32.mrb[0].mxu0
        %v487 = vadd.f32 %v310, %v486
        %v488 = vpop.f32.mrb[0].mxu0
        %489 = vmatprep.mubr.f32.mxu0 0.0
        %490 = vmatmul.mubr.f32.gmra.mrb[0].mxu0 %v340
        %v491 = vpop.f32.mrb[0].mxu0
        %v492 = vadd.f32 %v315, %v491
        %v493 = vpop.f32.mrb[0].mxu0
        %494 = vdwg.mxu0
        %v495 = vmax.f32 %v457, 0.0
        %v496 = vmax.f32 %v462, 0.0
        %v497 = vmax.f32 %v467, 0.0
        %v498 = vmax.f32 %v472, 0.0
        %v499 = vmax.f32 %v477, 0.0
        %v500 = vmax.f32 %v482, 0.0
        %v501 = vmax.f32 %v487, 0.0
        %v502 = vmax.f32 %v492, 0.0
        %v503 = vld [vmem:[%s3] sm:$0xf]
        %v504 = vld [vmem:[%s4] sm:$0xf]
        %506 = vset.pattern.permute.xlu0 0
        %507 = vperm.xlu0 %506, %v504
        %v508 = vpop.permute.xlu0 %507
        %vm510 = vcmask 523264
        %v512 = vsel %vm510, %v503, 0
        %514 = vmatprep.subr.mxu0 0.0
        %515 = vmatpush1.msra.mxu0 %v495
        %516 = vmatprep.subr.mxu0 0.0
        %517 = vmatpush1.msra.mxu0 %v496
        %518 = vmatprep.subr.mxu0 0.0
        %519 = vmatpush1.msra.mxu0 %v497
        %520 = vmatprep.subr.mxu0 0.0
        %521 = vmatpush1.msra.mxu0 %v498
        %522 = vmatprep.subr.mxu0 0.0
        %523 = vmatpush1.msra.mxu0 %v499
        %524 = vmatprep.subr.mxu0 0.0
        %525 = vmatpush1.msra.mxu0 %v500
        %526 = vmatprep.subr.mxu0 0.0
        %527 = vmatpush1.msra.mxu0 %v501
        %528 = vmatprep.subr.mxu0 0.0
        %529 = vmatpush1.msra.mxu0 %v502
        %530 = vmatprep.subr.mxu0 0.0
        %531 = vmatpush1.msra.mxu0 0.0
        %532 = vmatprep.subr.mxu0 0.0
        %533 = vmatpush1.msra.mxu0 0.0
        %534 = vmatprep.subr.mxu0 0.0
        %535 = vmatpush1.msra.mxu0 0.0
        %536 = vmatprep.subr.mxu0 0.0
        %537 = vmatpush1.msra.mxu0 0.0
        %538 = vmatprep.subr.mxu0 0.0
        %539 = vmatpush1.msra.mxu0 0.0
        %540 = vmatprep.subr.mxu0 0.0
        %541 = vmatpush1.msra.mxu0 0.0
        %542 = vmatprep.subr.mxu0 0.0
        %543 = vmatpush1.msra.mxu0 0.0
        %544 = vmatprep.subr.mxu0 0.0
        %545 = vmatpush1.msra.mxu0 0.0
        %546 = vmatprep.subr.mxu0 0.0
        %547 = vmatpush1.msra.mxu0 0.0
        %548 = vmatprep.subr.mxu0 0.0
        %549 = vmatpush1.msra.mxu0 0.0
        %550 = vmatprep.subr.mxu0 0.0
        %551 = vmatpush1.msra.mxu0 0.0
        %552 = vmatprep.subr.mxu0 0.0
        %553 = vmatpush1.msra.mxu0 0.0
        %554 = vmatprep.subr.mxu0 0.0
        %555 = vmatpush1.msra.mxu0 0.0
        %556 = vmatprep.subr.mxu0 0.0
        %557 = vmatpush1.msra.mxu0 0.0
        %558 = vmatprep.subr.mxu0 0.0
        %559 = vmatpush1.msra.mxu0 0.0
        %560 = vmatprep.subr.mxu0 0.0
        %561 = vmatpush1.msra.mxu0 0.0
        %562 = vmatprep.subr.mxu0 0.0
        %563 = vmatpush1.msra.mxu0 0.0
        %564 = vmatprep.subr.mxu0 0.0
        %565 = vmatpush1.msra.mxu0 0.0
        %566 = vmatprep.subr.mxu0 0.0
        %567 = vmatpush1.msra.mxu0 0.0
        %568 = vmatprep.subr.mxu0 0.0
        %569 = vmatpush1.msra.mxu0 0.0
        %570 = vmatprep.subr.mxu0 0.0
        %571 = vmatpush1.msra.mxu0 0.0
        %572 = vmatprep.subr.mxu0 0.0
        %573 = vmatpush1.msra.mxu0 0.0
        %574 = vmatprep.subr.mxu0 0.0
        %575 = vmatpush1.msra.mxu0 0.0
        %576 = vmatprep.subr.mxu0 0.0
        %577 = vmatpush1.msra.mxu0 0.0
        %578 = vmatprep.mubr.f32.mxu0 0.0
        %579 = vmatmul.mubr.f32.gmra.mrb[0].mxu0 %v512
        %v580 = vpop.f32.mrb[0].mxu0
        %v581 = vadd.f32 %v508, %v580
        %v582 = vpop.f32.mrb[0].mxu0
        %583 = vdwg.mxu0
        %584 = vst [vmem:[%s230] sm:$0xf] %v581
        %s585 = sand.u32 %s137, 1
        %s586 = scalar_lea.sflag [#allocation3], %s585
        %s587 = sand.u32 %s137, 1
        %s588 = smul.addr %s587, 4
        %s589 = scalar_lea.vmem [#allocation2], %s588
        // Predicated region
        $region41: #{tpu_custom_call.1} parent=39 // pred_check
          %p590 = pneg %p147
        $region42: #{tpu_custom_call.1} parent=39 // pred_check_branch
          %592 = sbr.rel (%p590) target = $region44
        $region43: #{tpu_custom_call.1} parent=39 // pred_region
          %s594 = ssub.s32 64, 64
          %595 = vsyncadd %s586, %s594
          %s596 = smul.addr %s19, 64
          %s597 = scalar_lea.hbm %s5, %s596
          %s599 = sshll.u32 %s589, 4
          %s600 = int_to_ptr.vmem [resolvable:$true] %s599
          %602 = dma.vmem_to_hbm [thread:$0]  %s600, 64, %s597, %s586
        $region44: #{tpu_custom_call.1} parent=39 // pred_fallthru
          _
      $region40: #{tpu_custom_call.1} parent=5 // pred_fallthru
        _
      %p603 = scmp.le.s32.totalorder 2, %s14
      // Predicated region
      $region45: #{tpu_custom_call.1} parent=5 // pred_check
        %p604 = pneg %p603
      $region46: #{tpu_custom_call.1} parent=5 // pred_check_branch
        %606 = sbr.rel (%p604) target = $region48
      $region47: #{tpu_custom_call.1} parent=5 // pred_region
        %s607 = ssub.s32 %s14, 2
        // Predicated region
        $region49: #{tpu_custom_call.1} parent=47 // pred_check
          %p608 = pneg %p153
        $region50: #{tpu_custom_call.1} parent=47 // pred_check_branch
          %610 = sbr.rel (%p608) target = $region52
        $region51: #{tpu_custom_call.1} parent=47 // pred_region
          %s611 = sand.u32 %s138, 1
          %s612 = scalar_lea.sflag [#allocation3], %s611
          %s613 = sand.u32 %s138, 1
          %s614 = smul.addr %s613, 4
          %s615 = scalar_lea.vmem [#allocation2], %s614
          %616 = dma.done %s612, 64
        $region52: #{tpu_custom_call.1} parent=47 // pred_fallthru
          _
      $region48: #{tpu_custom_call.1} parent=5 // pred_fallthru
        _
    $region6: #{tpu_custom_call.1} parent=1 // loop_footer
      %s18 = sadd.s32 1, %s14
    $region7: #{tpu_custom_call.1} parent=1 // loop_footer_branch
      %13 = sbr.rel target = $region3
    $region8: #{tpu_custom_call.1} parent=1 // loop_exit
      _
    %617 = vsyncpa [#allocation3], 1
    %s618 = scalar_lea.sflag [#allocation3], 1
    %619 = vsyncpa %s618, 1

</llo_original>
